<compile_context>
chip_gen: v6e
topology: v6e:2x2x1
jax: 0.10.0
libtpu: 0.0.40
codegen_flags: <defaults>
</compile_context>

<pallas_src>
import jax
import jax.numpy as jnp
from jax.experimental import pallas as pl
from jax.experimental.pallas import tpu as pltpu


def _round_up(n: int, m: int) -> int:
    return ((n + m - 1) // m) * m


def _conv3x3_relu_kernel(x_ref, w_ref, b_ref, o_ref):
    """One batch element per grid step.

    x_ref: (1, H+2, Kb)    bf16  lane-dense, spatially padded input rows
    w_ref: (3*Kb, Nb)      bf16  banded weights (tap/dx shifts folded in)
    b_ref: (1, Nb)         f32   bias pre-tiled across W (lane-dense)
    o_ref: (1, H, Nb)      f32   lane-dense output (Nb = roundup(W*Cout,128))
    """
    H = o_ref.shape[1]

    # Three shifted row bands (dy = 0, 1, 2); the dx shift is encoded in the
    # banded weight matrix, so no per-tap lane slicing / shifted copies.
    bands = [x_ref[0, dy:dy + H, :] for dy in range(3)]      # 3 x (H, Kb)
    lhs = jnp.concatenate(bands, axis=-1)                    # (H, 3*Kb), 128-aligned pieces

    # Single MXU contraction: K = 3*Kb, N = Nb, f32 accumulation.
    acc = jax.lax.dot_general(
        lhs, w_ref[...],
        dimension_numbers=(((1,), (0,)), ((), ())),
        preferred_element_type=jnp.float32,
    )                                                        # (H, Nb) f32

    acc = acc + b_ref[...]                                   # (1, Nb) broadcast over H
    o_ref[0, :, :] = jnp.maximum(acc, 0.0).astype(o_ref.dtype)


def conv_block_forward(x_nchw, weight_oihw, bias):
    """Pallas ConvBlock forward (matches PyTorch Conv2d(3x3, pad=1) + ReLU).

    x_nchw:      (B, Cin, H, W)    float32
    weight_oihw: (Cout, Cin, 3, 3) float32 (PyTorch layout)
    bias:        (Cout,)           float32
    returns:     (B, Cout, H, W)   float32
    """
    B, Cin, H, W = x_nchw.shape
    Cout = weight_oihw.shape[0]
    assert weight_oihw.shape == (Cout, Cin, 3, 3)

    lane_in = (W + 2) * Cin              # real lanes per padded input row
    lane_out = W * Cout                  # real lanes per output row
    Kb = _round_up(lane_in, 128)         # lane-dense, 128-aligned band width
    Nb = _round_up(lane_out, 128)        # lane-dense, 128-aligned output width

    # ---- layout plumbing (outside the hot path) -------------------------
    # Input: NCHW -> NHWC, zero-pad H/W by 1, flatten (W+2, Cin) onto lanes,
    # pad lanes to a multiple of 128, cast to bf16.
    x_nhwc = jnp.transpose(x_nchw, (0, 2, 3, 1))                       # (B, H, W, Cin)
    x_pad = jnp.pad(x_nhwc, ((0, 0), (1, 1), (1, 1), (0, 0)))          # (B, H+2, W+2, Cin)
    x_flat = x_pad.reshape(B, H + 2, lane_in)
    x_flat = jnp.pad(x_flat, ((0, 0), (0, 0), (0, Kb - lane_in)))
    x_flat = x_flat.astype(jnp.bfloat16)                               # (B, H+2, Kb)

    # Weights: fold the 3 dx taps into a banded matrix per dy band so the 3x3
    # conv becomes ONE matmul with lane-dense operands and result.
    #   w_band[dy, xp*Cin + c, x*Cout + o] = weight[o, c, dy, dx]  where xp == x + dx
    w_taps = jnp.transpose(weight_oihw, (2, 3, 1, 0)).astype(jnp.float32)   # (3,3,Cin,Cout) [dy,dx,c,o]
    xp = jnp.arange(W + 2)
    xo = jnp.arange(W)
    dx = jnp.arange(3)
    shift = (xp[None, :, None] == xo[None, None, :] + dx[:, None, None])    # (3, W+2, W)
    shift = shift.astype(jnp.float32)
    w_band = jnp.einsum("dpx,edco->epcxo", shift, w_taps)                   # (3, W+2, Cin, W, Cout)
    w_band = w_band.reshape(3, lane_in, lane_out)
    w_band = jnp.pad(w_band, ((0, 0), (0, Kb - lane_in), (0, Nb - lane_out)))
    w_band = w_band.reshape(3 * Kb, Nb).astype(jnp.bfloat16)                # (3*Kb, Nb)

    # Bias: pre-tile across W so the in-kernel add is a single lane-dense op.
    b_flat = jnp.tile(bias.astype(jnp.float32), W)                          # (W*Cout,)
    b_flat = jnp.pad(b_flat, (0, Nb - lane_out)).reshape(1, Nb)             # (1, Nb)

    out_flat = pl.pallas_call(
        _conv3x3_relu_kernel,
        out_shape=jax.ShapeDtypeStruct((B, H, Nb), jnp.float32),
        grid_spec=pltpu.PrefetchScalarGridSpec(
            num_scalar_prefetch=0,
            grid=(B,),
            in_specs=[
                pl.BlockSpec((1, H + 2, Kb), lambda b: (b, 0, 0)),
                pl.BlockSpec((3 * Kb, Nb), lambda b: (0, 0)),   # resident across steps
                pl.BlockSpec((1, Nb), lambda b: (0, 0)),        # resident across steps
            ],
            out_specs=pl.BlockSpec((1, H, Nb), lambda b: (b, 0, 0)),
        ),
        compiler_params=pltpu.CompilerParams(
            dimension_semantics=("parallel",),   # B shards across v7x's 2 TCs
            vmem_limit_bytes=32 * 1024 * 1024,
        ),
    )(x_flat, w_band, b_flat)

    # Drop lane padding, unflatten (W, Cout), back to NCHW.
    out_nhwc = out_flat[:, :, :lane_out].reshape(B, H, W, Cout)
    return jnp.transpose(out_nhwc, (0, 3, 1, 2))


if __name__ == "__main__":
    key = jax.random.PRNGKey(0)
    k_x, k_w, k_b = jax.random.split(key, 3)

    B, Cin, H, W = 2, 4, 16, 16
    Cout = 8

    # Deterministic PyTorch-like uniform(-bound, bound) init.
    fan_in = Cin * 3 * 3
    bound = 1.0 / (fan_in ** 0.5)
    x = jax.random.normal(k_x, (B, Cin, H, W), dtype=jnp.float32)
    weight = jax.random.uniform(k_w, (Cout, Cin, 3, 3), jnp.float32, -bound, bound)
    bias = jax.random.uniform(k_b, (Cout,), jnp.float32, -bound, bound)

    conv_block = jax.jit(conv_block_forward)
    out = jax.block_until_ready(conv_block(x, weight, bias))

    # Reference: XLA conv (NCHW, OIHW), padding=1, + bias + ReLU, in f32.
    ref = jax.lax.conv_general_dilated(
        x, weight, window_strides=(1, 1), padding=((1, 1), (1, 1)),
        dimension_numbers=("NCHW", "OIHW", "NCHW"),
    ) + bias[None, :, None, None]
    ref = jnp.maximum(ref, 0.0)

    assert out.shape == (B, Cout, H, W)
    assert out.dtype == jnp.float32
    max_err = float(jnp.max(jnp.abs(out - ref)))
    # bf16 activations/weights with f32 accumulation -> loosened tolerance.
    assert jnp.allclose(out, ref, atol=3e-2, rtol=3e-2), (
        f"mismatch vs reference conv (max abs err {max_err})")

    print("KERNEL_OK")
</pallas_src>

<mosaic_0001>
module attributes {stable_mosaic.version = 11 : i64} {
  func.func @_conv3x3_relu_kernel(%arg0: i32, %arg1: memref<1x18x128xbf16, #tpu.memory_space<vmem>>, %arg2: memref<384x128xbf16, #tpu.memory_space<vmem>>, %arg3: memref<1x128xf32, #tpu.memory_space<vmem>>, %arg4: memref<1x16x128xf32, #tpu.memory_space<vmem>>) attributes {dimension_semantics = [#tpu.dimension_semantics<parallel>], iteration_bounds = array<i64: 2>, scalar_prefetch = 0 : i64, scratch_operands = 0 : i64, tpu.core_type = #tpu.core_type<tc>, window_params = [{transform_indices = @transform_0, window_bounds = array<i64: 1, 18, 128>}, {pipeline_mode = #tpu.pipeline_mode<synchronous>, transform_indices = @transform_1, window_bounds = array<i64: 384, 128>}, {pipeline_mode = #tpu.pipeline_mode<synchronous>, transform_indices = @transform_2, window_bounds = array<i64: 1, 128>}, {transform_indices = @transform_3, window_bounds = array<i64: 1, 16, 128>}]} {
    %c0 = arith.constant 0 : index
    %c0_0 = arith.constant 0 : index
    %c0_1 = arith.constant 0 : index
    %0 = vector.load %arg1[%c0, %c0_0, %c0_1] : memref<1x18x128xbf16, #tpu.memory_space<vmem>>, vector<1x16x128xbf16>
    %1 = vector.shape_cast %0 : vector<1x16x128xbf16> to vector<16x128xbf16>
    %c0_2 = arith.constant 0 : index
    %c1 = arith.constant 1 : index
    %c0_3 = arith.constant 0 : index
    %2 = vector.load %arg1[%c0_2, %c1, %c0_3] : memref<1x18x128xbf16, #tpu.memory_space<vmem>>, vector<1x16x128xbf16>
    %3 = vector.shape_cast %2 : vector<1x16x128xbf16> to vector<16x128xbf16>
    %c0_4 = arith.constant 0 : index
    %c2 = arith.constant 2 : index
    %c0_5 = arith.constant 0 : index
    %4 = vector.load %arg1[%c0_4, %c2, %c0_5] : memref<1x18x128xbf16, #tpu.memory_space<vmem>>, vector<1x16x128xbf16>
    %5 = vector.shape_cast %4 : vector<1x16x128xbf16> to vector<16x128xbf16>
    %6 = tpu.concatenate %1, %3, %5 in 1 : vector<16x128xbf16>, vector<16x128xbf16>, vector<16x128xbf16> -> vector<16x384xbf16>
    %c0_6 = arith.constant 0 : index
    %c0_7 = arith.constant 0 : index
    %7 = vector.load %arg2[%c0_6, %c0_7] : memref<384x128xbf16, #tpu.memory_space<vmem>>, vector<384x128xbf16>
    %cst = arith.constant dense<0.000000e+00> : vector<16x128xf32>
    %8 = tpu.matmul %6, %7, %cst {dimension_numbers = #tpu.dot_dimension_numbers<[1], [0], [0], [1], [0, 0, 1, 1], [], []>} : vector<16x384xbf16>, vector<384x128xbf16>, vector<16x128xf32> -> vector<16x128xf32>
    %c0_8 = arith.constant 0 : index
    %c0_9 = arith.constant 0 : index
    %9 = vector.load %arg3[%c0_8, %c0_9] : memref<1x128xf32, #tpu.memory_space<vmem>>, vector<1x128xf32>
    %10 = vector.broadcast %9 : vector<1x128xf32> to vector<16x128xf32>
    %11 = arith.addf %8, %10 : vector<16x128xf32>
    %cst_10 = arith.constant 0.000000e+00 : f32
    %12 = vector.broadcast %cst_10 : f32 to vector<16x128xf32>
    %13 = arith.maximumf %11, %12 : vector<16x128xf32>
    %c0_11 = arith.constant 0 : index
    %c0_12 = arith.constant 0 : index
    %c0_13 = arith.constant 0 : index
    %14 = vector.load %arg4[%c0_11, %c0_12, %c0_13] : memref<1x16x128xf32, #tpu.memory_space<vmem>>, vector<1x16x128xf32>
    %15 = vector.shape_cast %14 : vector<1x16x128xf32> to vector<16x128xf32>
    %16 = vector.shape_cast %13 : vector<16x128xf32> to vector<1x16x128xf32>
    tpu.vector_store %arg4[%c0_11, %c0_12, %c0_13], %16 {strides = array<i32>} : memref<1x16x128xf32, #tpu.memory_space<vmem>>, vector<1x16x128xf32>,
    return
  }
  func.func @transform_0(%arg0: i32) -> (i32, i32, i32) {
    %c0_i32 = arith.constant 0 : i32
    %c0_i32_0 = arith.constant 0 : i32
    %c0_i32_1 = arith.constant 0 : i32
    return %arg0, %c0_i32, %c0_i32_0 : i32, i32, i32
  }
  func.func @transform_1(%arg0: i32) -> (i32, i32) {
    %c0_i32 = arith.constant 0 : i32
    %c0_i32_0 = arith.constant 0 : i32
    %c0_i32_1 = arith.constant 0 : i32
    return %c0_i32, %c0_i32_0 : i32, i32
  }
  func.func @transform_2(%arg0: i32) -> (i32, i32) {
    %c0_i32 = arith.constant 0 : i32
    %c0_i32_0 = arith.constant 0 : i32
    %c0_i32_1 = arith.constant 0 : i32
    return %c0_i32, %c0_i32_0 : i32, i32
  }
  func.func @transform_3(%arg0: i32) -> (i32, i32, i32) {
    %c0_i32 = arith.constant 0 : i32
    %c0_i32_0 = arith.constant 0 : i32
    %c0_i32_1 = arith.constant 0 : i32
    return %arg0, %c0_i32, %c0_i32_0 : i32, i32, i32
  }
}

</mosaic_0001>

<llo_original>
// kernel: tile.8
$region0: #{tile.8}
  #allocation0 [shape = 's32[1]{0}', space=sflag, size = 0x4, scoped, tag = 'scoped memory for tile.8']
  %s0 = inlined_call_operand.vmem [shape: f32[8], index: 0, kind: input, shape index: {}]
  %s1 = inlined_call_operand.vmem [shape: f32[16,8], index: 1, kind: output, shape index: {}]
  // Predicated region
  $region2: #{tile.8} parent=0 // pred_check
    _
  $region3: #{tile.8} parent=0 // pred_check_branch
    %3 = sbr.rel (0) target = $region5
  $region4: #{tile.8} parent=0 // pred_region
    _
  $region5: #{tile.8} parent=0 // pred_fallthru
    _
  %v4 = vld [vmem:[%s0] ss:$0 sm:$0xff]
  %5 = vst [vmem:[%s1] sm:$0xff] %v4
  %s6 = scalar_lea.vmem %s1, 8
  %7 = vst [vmem:[%s6] sm:$0xff] %v4

// kernel: conv_block_forward.1
$region0: #{conv_block_forward.1}
  #allocation0 [shape = 'u32[]', space=smem, size = 0x4, offset = 0x4, fixed_abs, tag = 'smem constant byte address 0x4 - core index']
  #allocation1 [shape = 'u32[144,128]{1,0:T(1,128)}', space=vmem, size = 0x12000, scoped, tag = 'internal scratch']
  %s0 = inlined_call_operand.vmem [shape: bf16[2,18,128], index: 0, kind: input, shape index: {}]
  %s1 = inlined_call_operand.vmem [shape: bf16[384,128], index: 1, kind: input, shape index: {}]
  %s2 = inlined_call_operand.vmem [shape: f32[1,128], index: 2, kind: input, shape index: {}]
  %s3 = inlined_call_operand.vmem [shape: f32[2,16,128], index: 3, kind: output, shape index: {}]
  %s4 = sld [smem:[#allocation0]]
  $region45: #{conv_block_forward.1} parent=0
    _
  %s6 = ssub.s32 1, %s4
  %s7 = scalar_select 0, %s6, %s4
  loop: start=0, step=1, limit=4
  $region2: #{conv_block_forward.1} parent=0 // loop_pre_header
    _
  $region3: #{conv_block_forward.1} parent=0 // loop_header
    %s9 = sphi 0, %s13
    %p10 = scmp.ge.s32.totalorder %s9, 4
    %s19 = sphi 0, %s21
    %s22 = sphi 0, %s19
    %s23 = sphi 0, %s22
    %s39 = sphi 0, %s23
    %s43 = sphi 0, %s43
    %s45 = sphi 0, %s43
    %s46 = sphi 0, %s45
    %s60 = sphi 0, %s46
    %s64 = sphi 0, %s64
    %s66 = sphi 0, %s64
    %s67 = sphi 0, %s66
    %s81 = sphi 0, %s67
    %s87 = sphi 0, %s89
    %s90 = sphi 0, %s87
    %s91 = sphi 0, %s90
    %s107 = sphi 0, %s91
  $region4: #{conv_block_forward.1} parent=0 // loop_header_branch
    %12 = sbr.rel (%p10) target = $region8
  $region5: #{conv_block_forward.1} parent=0 // loop_body
    %s14 = ssub.s32 %s9, 1
    %s15 = ssub.s32 %s9, 2
    %s16 = sadd.s32 %s9, 1
    %s17 = ssub.s32 %s9, %s16
    %p18 = scmp.eq.s32.totalorder %s17, 0
    %s20 = sadd.s32 %s19, 1
    %s21 = scalar_select %p18, %s19, %s20
    %p24 = pneg %p18
    %p25 = scmp.eq.s32.totalorder %s9, 1
    %p26 = por %p24, %p25
    %p27 = scmp.ne.s32.totalorder %s19, %s22
    %p28 = scmp.eq.s32.totalorder %s9, 0
    %p29 = por %p27, %p28
    %p30 = scmp.ne.s32.totalorder %s19, %s22
    %p31 = scmp.eq.s32.totalorder %s14, 1
    %p32 = por %p30, %p31
    %p33 = scmp.ne.s32.totalorder %s22, %s23
    %p34 = scmp.eq.s32.totalorder %s14, 0
    %p35 = por %p33, %p34
    %p36 = scmp.ne.s32.totalorder %s22, %s23
    %p37 = scmp.eq.s32.totalorder %s15, 1
    %p38 = por %p36, %p37
    %p40 = scmp.ne.s32.totalorder %s23, %s39
    %p41 = scmp.eq.s32.totalorder %s15, 0
    %p42 = por %p40, %p41
    %s44 = sadd.s32 %s43, 1
    %p47 = scmp.eq.s32.totalorder %s9, 1
    %p48 = scmp.ne.s32.totalorder %s43, %s45
    %p49 = scmp.eq.s32.totalorder %s9, 0
    %p50 = por %p48, %p49
    %p51 = scmp.ne.s32.totalorder %s43, %s45
    %p52 = scmp.eq.s32.totalorder %s14, 1
    %p53 = por %p51, %p52
    %p54 = scmp.ne.s32.totalorder %s45, %s46
    %p55 = scmp.eq.s32.totalorder %s14, 0
    %p56 = por %p54, %p55
    %p57 = scmp.ne.s32.totalorder %s45, %s46
    %p58 = scmp.eq.s32.totalorder %s15, 1
    %p59 = por %p57, %p58
    %p61 = scmp.ne.s32.totalorder %s46, %s60
    %p62 = scmp.eq.s32.totalorder %s15, 0
    %p63 = por %p61, %p62
    %s65 = sadd.s32 %s64, 1
    %p68 = scmp.eq.s32.totalorder %s9, 1
    %p69 = scmp.ne.s32.totalorder %s64, %s66
    %p70 = scmp.eq.s32.totalorder %s9, 0
    %p71 = por %p69, %p70
    %p72 = scmp.ne.s32.totalorder %s64, %s66
    %p73 = scmp.eq.s32.totalorder %s14, 1
    %p74 = por %p72, %p73
    %p75 = scmp.ne.s32.totalorder %s66, %s67
    %p76 = scmp.eq.s32.totalorder %s14, 0
    %p77 = por %p75, %p76
    %p78 = scmp.ne.s32.totalorder %s66, %s67
    %p79 = scmp.eq.s32.totalorder %s15, 1
    %p80 = por %p78, %p79
    %p82 = scmp.ne.s32.totalorder %s67, %s81
    %p83 = scmp.eq.s32.totalorder %s15, 0
    %p84 = por %p82, %p83
    %s85 = ssub.s32 %s9, %s16
    %p86 = scmp.eq.s32.totalorder %s85, 0
    %s88 = sadd.s32 %s87, 1
    %s89 = scalar_select %p86, %s87, %s88
    %p92 = pneg %p86
    %p93 = scmp.eq.s32.totalorder %s9, 1
    %p94 = por %p92, %p93
    %p95 = scmp.ne.s32.totalorder %s87, %s90
    %p96 = scmp.eq.s32.totalorder %s9, 0
    %p97 = por %p95, %p96
    %p98 = scmp.ne.s32.totalorder %s87, %s90
    %p99 = scmp.eq.s32.totalorder %s14, 1
    %p100 = por %p98, %p99
    %p101 = scmp.ne.s32.totalorder %s90, %s91
    %p102 = scmp.eq.s32.totalorder %s14, 0
    %p103 = por %p101, %p102
    %p104 = scmp.ne.s32.totalorder %s90, %s91
    %p105 = scmp.eq.s32.totalorder %s15, 1
    %p106 = por %p104, %p105
    %p108 = scmp.ne.s32.totalorder %s91, %s107
    %p109 = scmp.eq.s32.totalorder %s15, 0
    %p110 = por %p108, %p109
    %p111 = scmp.le.s32.totalorder 1, %s9
    %p112 = scmp.lt.s32.totalorder %s9, 3
    %p113 = pnand %p111, %p112
    %p114 = pneg %p113
    // Predicated region
    $region9: #{conv_block_forward.1} parent=5 // pred_check
      _
    $region10: #{conv_block_forward.1} parent=5 // pred_check_branch
      %116 = sbr.rel (%p113) target = $region12
    $region11: #{conv_block_forward.1} parent=5 // pred_region
      %s117 = ssub.s32 %s9, 1
      // Predicated region
      $region13: #{conv_block_forward.1} parent=11 // pred_check
        %p118 = pneg %p56
      $region14: #{conv_block_forward.1} parent=11 // pred_check_branch
        %120 = sbr.rel (%p118) target = $region16
      $region15: #{conv_block_forward.1} parent=11 // pred_region
        _
      $region16: #{conv_block_forward.1} parent=11 // pred_fallthru
        _
      // Predicated region
      $region17: #{conv_block_forward.1} parent=11 // pred_check
        %p121 = pneg %p77
      $region18: #{conv_block_forward.1} parent=11 // pred_check_branch
        %123 = sbr.rel (%p121) target = $region20
      $region19: #{conv_block_forward.1} parent=11 // pred_region
        _
      $region20: #{conv_block_forward.1} parent=11 // pred_fallthru
        _
    $region12: #{conv_block_forward.1} parent=5 // pred_fallthru
      _
    %p124 = scmp.lt.s32.totalorder %s9, 2
    // Predicated region
    $region21: #{conv_block_forward.1} parent=5 // pred_check
      %p125 = pneg %p124
    $region22: #{conv_block_forward.1} parent=5 // pred_check_branch
      %127 = sbr.rel (%p125) target = $region24
    $region23: #{conv_block_forward.1} parent=5 // pred_region
      // Predicated region
      $region25: #{conv_block_forward.1} parent=23 // pred_check
        %p128 = pneg %p29
      $region26: #{conv_block_forward.1} parent=23 // pred_check_branch
        %130 = sbr.rel (%p128) target = $region28
      $region27: #{conv_block_forward.1} parent=23 // pred_region
        %p131 = scmp.lt.s32.totalorder %s9, 1
        %s132 = scalar_select %p131, %s9, 1
        %s133 = smul.addr %s132, 3
        %s134 = smul.addr %s133, 4
        %s135 = scalar_lea.vmem %s0, %s134
      $region28: #{conv_block_forward.1} parent=23 // pred_fallthru
        _
    $region24: #{conv_block_forward.1} parent=5 // pred_fallthru
      _
    %p136 = scmp.le.s32.totalorder 1, %s9
    %p137 = scmp.lt.s32.totalorder %s9, 3
    %p138 = pnand %p136, %p137
    %p139 = pneg %p138
    // Predicated region
    $region29: #{conv_block_forward.1} parent=5 // pred_check
      _
    $region30: #{conv_block_forward.1} parent=5 // pred_check_branch
      %141 = sbr.rel (%p138) target = $region32
    $region31: #{conv_block_forward.1} parent=5 // pred_region
      %s142 = ssub.s32 %s9, 1
      %p143 = scmp.lt.s32.totalorder %s14, 1
      %s144 = scalar_select %p143, %s14, 1
      %s145 = smul.addr %s144, 3
      %s146 = smul.addr %s145, 4
      %s147 = scalar_lea.vmem %s0, %s146
      %p148 = pneg %p35
      %p149 = pneg %p32
      %p150 = pneg %p56
      %p151 = pneg %p53
      %p152 = pneg %p77
      %p153 = pneg %p74
      %p154 = pneg %p103
      %p155 = pneg %p100
      %p156 = scmp.lt.s32.totalorder %s14, 1
      %s157 = scalar_select %p156, %s14, 1
      %s158 = smul.addr %s157, 2
      %s159 = smul.addr %s158, 8
      %s160 = scalar_lea.vmem %s3, %s159
      %p161 = scmp.lt.s32.totalorder %s14, 1
      %s162 = scalar_select %p161, %s14, 1
      %s163 = smul.addr %s162, 3
      %s164 = smul.addr %s163, 4
      %s165 = scalar_lea.vmem %s0, %s164
      %p166 = scmp.lt.s32.totalorder %s14, 1
      %s167 = scalar_select %p166, %s14, 1
      %s168 = smul.addr %s167, 2
      %s169 = smul.addr %s168, 8
      %s170 = scalar_lea.vmem %s3, %s169
      %v172 = vld [vmem:[%s165] sm:$0xf]
      %v173 = vld [vmem:[%s165 + $0x4] sm:$0xf]
      %v174 = vld [vmem:[%s165 + $0x8] sm:$0x1]
      %v175 = vld [vmem:[%s165] sm:$0xe]
      %v178 = vunpack.c.l.b16 %v172
      %v179 = vunpack.c.l.b16 %v173
      %v180 = vpack.c.b16 %v179, %v178
      %v183 = vunpack.c.l.b16 %v174
      %v184 = vpack.c.b16 %v183, %v183
      %vm185 = vsmask.f32 7424
      %v187 = vshrl.u32 %v180, 16
      %v189 = vshll.u32 %v180, 16
      %v191 = vrot.slane %v189, 1
      %v192 = vor.u32 %v187, %v191
      %v194 = vshll.u32 %v184, 16
      %v196 = vrot.slane %v194, 1
      %v197 = vsel %vm185, %v192, %v196
      %v200 = vunpack.c.l.b16 %v175
      %v201 = vpack.c.b16 %v179, %v200
      %vm202 = vcmask 1046528
      %v203 = vrot.slane %v201, 1
      %v204 = vrot.slane %v184, 1
      %v205 = vsel %vm202, %v203, %v204
      %v207 = vld [vmem:[%s1] sm:$0xf]
      %v208 = vld [vmem:[%s1 + $0x4] sm:$0xf]
      %v209 = vld [vmem:[%s1 + $0x8] sm:$0xf]
      %v210 = vld [vmem:[%s1 + $0xc] sm:$0xf]
      %v211 = vld [vmem:[%s1 + $0x10] sm:$0xf]
      %v212 = vld [vmem:[%s1 + $0x14] sm:$0xf]
      %v213 = vld [vmem:[%s1 + $0x18] sm:$0xf]
      %v214 = vld [vmem:[%s1 + $0x1c] sm:$0xf]
      %v215 = vld [vmem:[%s1 + $0x20] sm:$0xf]
      %v216 = vld [vmem:[%s1 + $0x24] sm:$0xf]
      %v217 = vld [vmem:[%s1 + $0x28] sm:$0xf]
      %v218 = vld [vmem:[%s1 + $0x2c] sm:$0xf]
      %v219 = vld [vmem:[%s1 + $0x30] sm:$0xf]
      %v220 = vld [vmem:[%s1 + $0x34] sm:$0xf]
      %v221 = vld [vmem:[%s1 + $0x38] sm:$0xf]
      %v222 = vld [vmem:[%s1 + $0x3c] sm:$0xf]
      %v223 = vld [vmem:[%s1 + $0x40] sm:$0xf]
      %v224 = vld [vmem:[%s1 + $0x44] sm:$0xf]
      %v225 = vld [vmem:[%s1 + $0x48] sm:$0xf]
      %v226 = vld [vmem:[%s1 + $0x4c] sm:$0xf]
      %v227 = vld [vmem:[%s1 + $0x50] sm:$0xf]
      %v228 = vld [vmem:[%s1 + $0x54] sm:$0xf]
      %v229 = vld [vmem:[%s1 + $0x58] sm:$0xf]
      %v230 = vld [vmem:[%s1 + $0x5c] sm:$0xf]
      %v231 = vld [vmem:[%s1 + $0x60] sm:$0xf]
      %v232 = vld [vmem:[%s1 + $0x64] sm:$0xf]
      %v233 = vld [vmem:[%s1 + $0x68] sm:$0xf]
      %v234 = vld [vmem:[%s1 + $0x6c] sm:$0xf]
      %v235 = vld [vmem:[%s1 + $0x70] sm:$0xf]
      %v236 = vld [vmem:[%s1 + $0x74] sm:$0xf]
      %v237 = vld [vmem:[%s1 + $0x78] sm:$0xf]
      %v238 = vld [vmem:[%s1 + $0x7c] sm:$0xf]
      %v239 = vld [vmem:[%s1 + $0x80] sm:$0xf]
      %v240 = vld [vmem:[%s1 + $0x84] sm:$0xf]
      %v241 = vld [vmem:[%s1 + $0x88] sm:$0xf]
      %v242 = vld [vmem:[%s1 + $0x8c] sm:$0xf]
      %v243 = vld [vmem:[%s1 + $0x90] sm:$0xf]
      %v244 = vld [vmem:[%s1 + $0x94] sm:$0xf]
      %v245 = vld [vmem:[%s1 + $0x98] sm:$0xf]
      %v246 = vld [vmem:[%s1 + $0x9c] sm:$0xf]
      %v247 = vld [vmem:[%s1 + $0xa0] sm:$0xf]
      %v248 = vld [vmem:[%s1 + $0xa4] sm:$0xf]
      %v249 = vld [vmem:[%s1 + $0xa8] sm:$0xf]
      %v250 = vld [vmem:[%s1 + $0xac] sm:$0xf]
      %v251 = vld [vmem:[%s1 + $0xb0] sm:$0xf]
      %v252 = vld [vmem:[%s1 + $0xb4] sm:$0xf]
      %v253 = vld [vmem:[%s1 + $0xb8] sm:$0xf]
      %v254 = vld [vmem:[%s1 + $0xbc] sm:$0xf]
      %v255 = vld [vmem:[%s2] sm:$0x1]
      %v257 = vlaneseq
      %v258 = vshrl.u32 %v257, 7
      %v259 = vsub.s32 0, %v258
      %v260 = vrot.slane %v255, %v259
      %v310 = vunpack.c.l.b16 %v207
      %v311 = vunpack.c.l.b16 %v208
      %v312 = vunpack.c.l.b16 %v209
      %v313 = vunpack.c.l.b16 %v210
      %v314 = vunpack.c.l.b16 %v211
      %v315 = vunpack.c.l.b16 %v212
      %v316 = vunpack.c.l.b16 %v213
      %v317 = vunpack.c.l.b16 %v214
      %v318 = vunpack.c.l.b16 %v215
      %v319 = vunpack.c.l.b16 %v216
      %v320 = vunpack.c.l.b16 %v217
      %v321 = vunpack.c.l.b16 %v218
      %v322 = vunpack.c.l.b16 %v219
      %v323 = vunpack.c.l.b16 %v220
      %v324 = vunpack.c.l.b16 %v221
      %v325 = vunpack.c.l.b16 %v222
      %v326 = vunpack.c.l.b16 %v223
      %v327 = vunpack.c.l.b16 %v224
      %v328 = vunpack.c.l.b16 %v225
      %v329 = vunpack.c.l.b16 %v226
      %v330 = vunpack.c.l.b16 %v227
      %v331 = vunpack.c.l.b16 %v228
      %v332 = vunpack.c.l.b16 %v229
      %v333 = vunpack.c.l.b16 %v230
      %v334 = vunpack.c.l.b16 %v231
      %v335 = vunpack.c.l.b16 %v232
      %v336 = vunpack.c.l.b16 %v233
      %v337 = vunpack.c.l.b16 %v234
      %v338 = vunpack.c.l.b16 %v235
      %v339 = vunpack.c.l.b16 %v236
      %v340 = vunpack.c.l.b16 %v237
      %v341 = vunpack.c.l.b16 %v238
      %v342 = vunpack.c.l.b16 %v239
      %v343 = vunpack.c.l.b16 %v240
      %v344 = vunpack.c.l.b16 %v241
      %v345 = vunpack.c.l.b16 %v242
      %v346 = vunpack.c.l.b16 %v243
      %v347 = vunpack.c.l.b16 %v244
      %v348 = vunpack.c.l.b16 %v245
      %v349 = vunpack.c.l.b16 %v246
      %v350 = vunpack.c.l.b16 %v247
      %v351 = vunpack.c.l.b16 %v248
      %v352 = vunpack.c.l.b16 %v249
      %v353 = vunpack.c.l.b16 %v250
      %v354 = vunpack.c.l.b16 %v251
      %v355 = vunpack.c.l.b16 %v252
      %v356 = vunpack.c.l.b16 %v253
      %v357 = vunpack.c.l.b16 %v254
      %v358 = vpack.c.b16 %v311, %v310
      %v359 = vpack.c.b16 %v313, %v312
      %v360 = vpack.c.b16 %v315, %v314
      %v361 = vpack.c.b16 %v317, %v316
      %v362 = vpack.c.b16 %v319, %v318
      %v363 = vpack.c.b16 %v321, %v320
      %v364 = vpack.c.b16 %v323, %v322
      %v365 = vpack.c.b16 %v325, %v324
      %v366 = vpack.c.b16 %v327, %v326
      %v367 = vpack.c.b16 %v329, %v328
      %v368 = vpack.c.b16 %v331, %v330
      %v369 = vpack.c.b16 %v333, %v332
      %v370 = vpack.c.b16 %v335, %v334
      %v371 = vpack.c.b16 %v337, %v336
      %v372 = vpack.c.b16 %v339, %v338
      %v373 = vpack.c.b16 %v341, %v340
      %v374 = vpack.c.b16 %v343, %v342
      %v375 = vpack.c.b16 %v345, %v344
      %v376 = vpack.c.b16 %v347, %v346
      %v377 = vpack.c.b16 %v349, %v348
      %v378 = vpack.c.b16 %v351, %v350
      %v379 = vpack.c.b16 %v353, %v352
      %v380 = vpack.c.b16 %v355, %v354
      %v381 = vpack.c.b16 %v357, %v356
      %406 = vmatprep.subr.bf16.mxu0 0
      %407 = vmatpush1.bf16.msra.mxu0 %v365
      %408 = vmatprep.subr.bf16.mxu0 0
      %409 = vmatpush1.bf16.msra.mxu0 %v364
      %410 = vmatprep.subr.bf16.mxu0 0
      %411 = vmatpush1.bf16.msra.mxu0 %v363
      %412 = vmatprep.subr.bf16.mxu0 0
      %413 = vmatpush1.bf16.msra.mxu0 %v362
      %414 = vmatprep.subr.bf16.mxu0 0
      %415 = vmatpush1.bf16.msra.mxu0 %v361
      %416 = vmatprep.subr.bf16.mxu0 0
      %417 = vmatpush1.bf16.msra.mxu0 %v360
      %418 = vmatprep.subr.bf16.mxu0 0
      %419 = vmatpush1.bf16.msra.mxu0 %v359
      %420 = vmatprep.subr.bf16.mxu0 0
      %421 = vmatpush1.bf16.msra.mxu0 %v358
      %422 = vmatprep.subr.bf16.mxu0 0
      %423 = vmatpush2.bf16.msra.mxu0 %v373
      %424 = vmatprep.subr.bf16.mxu0 0
      %425 = vmatpush2.bf16.msra.mxu0 %v372
      %426 = vmatprep.subr.bf16.mxu0 0
      %427 = vmatpush2.bf16.msra.mxu0 %v371
      %428 = vmatprep.subr.bf16.mxu0 0
      %429 = vmatpush2.bf16.msra.mxu0 %v370
      %430 = vmatprep.subr.bf16.mxu0 0
      %431 = vmatpush2.bf16.msra.mxu0 %v369
      %432 = vmatprep.subr.bf16.mxu0 0
      %433 = vmatpush2.bf16.msra.mxu0 %v368
      %434 = vmatprep.subr.bf16.mxu0 0
      %435 = vmatpush2.bf16.msra.mxu0 %v367
      %436 = vmatprep.subr.bf16.mxu0 0
      %437 = vmatpush2.bf16.msra.mxu0 %v366
      %438 = vmatprep.mubr.bf16.mxu0 %v197
      %439 = vmatmul.mubr.bf16.gmra.mxu0 %v180
      %v440 = vpop.f32.mrf.mxu0
      %v441 = vadd.f32 %v260, %v440
      %v442 = vpop.f32.mrf.mxu0
      %v443 = vpop.f32.mrf.mxu0
      %v444 = vadd.f32 %v260, %v443
      %v445 = vpop.f32.mrf.mxu0
      %446 = vdwg.mxu0
      %447 = vmatprep.subr.bf16.mxu0 0
      %448 = vmatpush1.bf16.msra.mxu0 %v381
      %449 = vmatprep.subr.bf16.mxu0 0
      %450 = vmatpush1.bf16.msra.mxu0 %v380
      %451 = vmatprep.subr.bf16.mxu0 0
      %452 = vmatpush1.bf16.msra.mxu0 %v379
      %453 = vmatprep.subr.bf16.mxu0 0
      %454 = vmatpush1.bf16.msra.mxu0 %v378
      %455 = vmatprep.subr.bf16.mxu0 0
      %456 = vmatpush1.bf16.msra.mxu0 %v377
      %457 = vmatprep.subr.bf16.mxu0 0
      %458 = vmatpush1.bf16.msra.mxu0 %v376
      %459 = vmatprep.subr.bf16.mxu0 0
      %460 = vmatpush1.bf16.msra.mxu0 %v375
      %461 = vmatprep.subr.bf16.mxu0 0
      %462 = vmatpush1.bf16.msra.mxu0 %v374
      %463 = vmatprep.subr.bf16.mxu0 0
      %464 = vmatpush2.bf16.msra.mxu0 0
      %465 = vmatprep.subr.bf16.mxu0 0
      %466 = vmatpush2.bf16.msra.mxu0 0
      %467 = vmatprep.subr.bf16.mxu0 0
      %468 = vmatpush2.bf16.msra.mxu0 0
      %469 = vmatprep.subr.bf16.mxu0 0
      %470 = vmatpush2.bf16.msra.mxu0 0
      %471 = vmatprep.subr.bf16.mxu0 0
      %472 = vmatpush2.bf16.msra.mxu0 0
      %473 = vmatprep.subr.bf16.mxu0 0
      %474 = vmatpush2.bf16.msra.mxu0 0
      %475 = vmatprep.subr.bf16.mxu0 0
      %476 = vmatpush2.bf16.msra.mxu0 0
      %477 = vmatprep.subr.bf16.mxu0 0
      %478 = vmatpush2.bf16.msra.mxu0 0
      %479 = vmatprep.mubr.bf16.mxu0 0
      %480 = vmatmul.mubr.bf16.gmra.mxu0 %v205
      %v481 = vpop.f32.mrf.mxu0
      %v482 = vadd.f32 %v441, %v481
      %v483 = vpop.f32.mrf.mxu0
      %v484 = vpop.f32.mrf.mxu0
      %v485 = vadd.f32 %v444, %v484
      %v486 = vpop.f32.mrf.mxu0
      %487 = vdwg.mxu0
      %v488 = vmax.f32 %v482, 0.0
      %v489 = vmax.f32 %v485, 0.0
      %490 = vst [vmem:[%s170] sm:$0xff] %v488
      %491 = vst [vmem:[%s170 + $0x8] sm:$0xff] %v489
      %p492 = scmp.lt.s32.totalorder %s14, 1
      %s493 = scalar_select %p492, %s14, 1
      %s494 = smul.addr %s493, 2
      %s495 = smul.addr %s494, 8
      %s496 = scalar_lea.vmem %s3, %s495
      // Predicated region
      $region33: #{conv_block_forward.1} parent=31 // pred_check
        %p497 = pneg %p100
      $region34: #{conv_block_forward.1} parent=31 // pred_check_branch
        %499 = sbr.rel (%p497) target = $region36
      $region35: #{conv_block_forward.1} parent=31 // pred_region
        _
      $region36: #{conv_block_forward.1} parent=31 // pred_fallthru
        _
    $region32: #{conv_block_forward.1} parent=5 // pred_fallthru
      _
    %p500 = scmp.le.s32.totalorder 2, %s9
    // Predicated region
    $region37: #{conv_block_forward.1} parent=5 // pred_check
      %p501 = pneg %p500
    $region38: #{conv_block_forward.1} parent=5 // pred_check_branch
      %503 = sbr.rel (%p501) target = $region40
    $region39: #{conv_block_forward.1} parent=5 // pred_region
      %s504 = ssub.s32 %s9, 2
      // Predicated region
      $region41: #{conv_block_forward.1} parent=39 // pred_check
        %p505 = pneg %p106
      $region42: #{conv_block_forward.1} parent=39 // pred_check_branch
        %507 = sbr.rel (%p505) target = $region44
      $region43: #{conv_block_forward.1} parent=39 // pred_region
        %p508 = scmp.lt.s32.totalorder %s15, 1
        %s509 = scalar_select %p508, %s15, 1
        %s510 = smul.addr %s509, 2
        %s511 = smul.addr %s510, 8
        %s512 = scalar_lea.vmem %s3, %s511
      $region44: #{conv_block_forward.1} parent=39 // pred_fallthru
        _
    $region40: #{conv_block_forward.1} parent=5 // pred_fallthru
      _
  $region6: #{conv_block_forward.1} parent=0 // loop_footer
    %s13 = sadd.s32 1, %s9
  $region7: #{conv_block_forward.1} parent=0 // loop_footer_branch
    %8 = sbr.rel target = $region3
  $region8: #{conv_block_forward.1} parent=0 // loop_exit
    _

</llo_original>
